<compile_context>
chip_gen: v6e
topology: v6e:2x2x1
jax: 0.10.0
libtpu: 0.0.40
codegen_flags: <defaults>
</compile_context>

<pallas_src>
import functools

import jax
import jax.numpy as jnp
from jax.experimental import pallas as pl
from jax.experimental.pallas import tpu as pltpu

LANE = 128
_MIB = 1024 * 1024


def _round_up(a, b):
    return (a + b - 1) // b * b


def _device_kind():
    try:
        return jax.devices()[0].device_kind.lower()
    except Exception:
        return ""


def _vmem_budgets():
    """Return (vmem_limit_bytes, per-tile byte budget), generation aware."""
    cap = None
    try:
        cap = getattr(pltpu.get_tpu_info(), "vmem_capacity_bytes", None)
    except Exception:
        cap = None
    if cap is None:
        # v5e / v6e: 128 MiB VMEM per TensorCore; v7x: 64 MiB.
        cap = 64 * _MIB if "7" in _device_kind() else 128 * _MIB
    if cap >= 100 * _MIB:
        return 64 * _MIB, 16 * _MIB       # v5e / v6e: larger tiles, fewer grid steps
    return 32 * _MIB, 8 * _MIB            # v7x-safe (64 MiB physical VMEM)


def _num_core_splits():
    """How many ways to split the HW reduction (v7x has 2 TensorCores per chip)."""
    # TODO(synk): if plain "parallel" does not shard across v7x TCs, switch the leading
    #             grid axis to pltpu.CORE_PARALLEL.
    return 2 if "7" in _device_kind() else 1


def _partial_sum_kernel(x_ref, part_ref, acc_ref, *, hw_total, hw_tile, blocks_per_split):
    """Phase 1: per-split tiled global sum over HW -> (1, N, C_in) partial sum."""
    s = pl.program_id(0)
    k = pl.program_id(1)

    @pl.when(k == 0)
    def _():
        acc_ref[...] = jnp.zeros_like(acc_ref)

    # Global (unclamped) lane offset of this block; the index_map clamps the DMA source,
    # masking below zeroes any duplicate / out-of-range data.
    start = (s * blocks_per_split + k) * hw_tile
    n_slices = hw_tile // LANE

    @pl.when(start + hw_tile <= hw_total)
    def _():
        # Fast path: whole tile in range — pure per-slice loads + adds, no masking.
        acc = acc_ref[...]
        for j in range(n_slices):                              # static, lane-aligned
            acc = acc + x_ref[:, :, j * LANE:(j + 1) * LANE].astype(jnp.float32)
        acc_ref[...] = acc

    @pl.when(start + hw_tile > hw_total)
    def _():
        # Boundary / out-of-range tile only: mask each 128-lane slice against hw_total.
        lane = jax.lax.broadcasted_iota(jnp.int32, (1, 1, LANE), 2)   # loop-invariant
        acc = acc_ref[...]
        for j in range(n_slices):
            xj = x_ref[:, :, j * LANE:(j + 1) * LANE].astype(jnp.float32)
            valid = lane < (hw_total - (start + j * LANE))
            acc = acc + jnp.where(valid, xj, 0.0)
        acc_ref[...] = acc

    @pl.when(k == pl.num_programs(1) - 1)
    def _():
        # Single cross-lane (XLU) reduce per split.
        part_ref[...] = jnp.sum(acc_ref[...], axis=-1)[None]          # (1, N, C_in)


def _broadcast_kernel(y_ref, o_ref):
    """Phase 2: broadcast the (N*C_out, 1) pooled result over a lane-dense HW tile."""
    o_ref[...] = jnp.broadcast_to(y_ref[...], o_ref.shape).astype(o_ref.dtype)


def aspp_pooling(x, conv_weight, bn_gamma, bn_beta, bn_mean, bn_var, eps=1e-5,
                 *, hw_tile=512, out_hw_tile=2048, out_dtype=None, num_splits=None):
    """ASPPPooling forward (BatchNorm in eval mode).

    x: (N, C_in, H, W), conv_weight: (C_out, C_in, 1, 1). Returns (N, C_out, H, W).
    For bandwidth-bound production use, pass bf16 `x` / `out_dtype=jnp.bfloat16`;
    accumulation and the epilogue stay in f32.
    """
    N, C_in, H, W = x.shape
    C_out = conv_weight.shape[0]
    HW = H * W
    out_dtype = x.dtype if out_dtype is None else out_dtype

    vmem_limit, tile_budget = _vmem_budgets()
    n_split = _num_core_splits() if num_splits is None else int(num_splits)

    # --- fold BN (eval) and the 1/(H*W) mean divisor into the 1x1-conv weight/bias ---
    scale = bn_gamma / jnp.sqrt(bn_var + eps)                               # (C_out,)
    w = (conv_weight.reshape(C_out, C_in).T * scale[None, :] / float(HW)
         ).astype(jnp.float32)                                              # (C_in, C_out)
    bias = (bn_beta - bn_mean * scale).astype(jnp.float32)                  # (C_out,)

    # Keep x in its native dtype: reshape is free (contiguous); cast per-slice in-kernel.
    x_flat = x.reshape(N, C_in, HW)

    # --- pick an HW tile for the reduction that fits the generation's VMEM budget ---
    in_itemsize = jnp.dtype(x.dtype).itemsize
    max_in_lanes = tile_budget // (2 * N * C_in * in_itemsize)              # double-buffered
    max_in_lanes = max(LANE, (max_in_lanes // LANE) * LANE)
    hw_tile = min(_round_up(hw_tile, LANE), max_in_lanes, _round_up(HW, LANE))

    blocks_total = pl.cdiv(HW, hw_tile)
    n_split = max(1, min(n_split, blocks_total))
    n_red = pl.cdiv(blocks_total, n_split)

    if n_split * n_red == blocks_total:
        x_index_map = lambda s, k: (0, 0, s * n_red + k)
    else:
        # Clamp the DMA source for the (few) out-of-range blocks; kernel masks them to 0.
        x_index_map = lambda s, k: (0, 0, jnp.minimum(s * n_red + k, blocks_total - 1))

    # --- phase 1: per-split pooled sums, tiled over HW ---
    partials = pl.pallas_call(
        functools.partial(_partial_sum_kernel, hw_total=HW, hw_tile=hw_tile,
                          blocks_per_split=n_red),
        out_shape=jax.ShapeDtypeStruct((n_split, N, C_in), jnp.float32),
        grid=(n_split, n_red),
        in_specs=[pl.BlockSpec((N, C_in, hw_tile), x_index_map)],
        out_specs=pl.BlockSpec((1, N, C_in), lambda s, k: (s, 0, 0)),
        scratch_shapes=[pltpu.VMEM((N, C_in, LANE), jnp.float32)],
        compiler_params=pltpu.CompilerParams(
            dimension_semantics=("parallel", "arbitrary"),   # split axis / reduction axis
            vmem_limit_bytes=vmem_limit,
        ),
        cost_estimate=pl.CostEstimate(
            flops=int(N * C_in * HW), transcendentals=0,
            bytes_accessed=int(x_flat.size * in_itemsize + n_split * N * C_in * 4)),
    )(x_flat)

    # --- tiny combine + folded 1x1-conv / BN / ReLU epilogue (plain JAX, negligible) ---
    pooled_sum = jnp.sum(partials, axis=0)                           # (N, C_in)
    y = jnp.maximum(jnp.dot(pooled_sum, w) + bias[None, :], 0.0)     # (N, C_out), f32

    # --- phase 2: broadcast (== align_corners bilinear upsample of a 1x1 map) ---
    out_itemsize = jnp.dtype(out_dtype).itemsize
    max_out_lanes = tile_budget // (2 * N * C_out * out_itemsize)
    max_out_lanes = max(LANE, (max_out_lanes // LANE) * LANE)
    out_hw_tile = min(_round_up(out_hw_tile, LANE), max_out_lanes, _round_up(HW, LANE))
    n_bcast = pl.cdiv(HW, out_hw_tile)

    y_rows = y.reshape(N * C_out, 1)                                 # tiny, free reshape
    out_flat = pl.pallas_call(
        _broadcast_kernel,
        out_shape=jax.ShapeDtypeStruct((N * C_out, HW), out_dtype),
        grid=(n_bcast,),
        in_specs=[pl.BlockSpec((N * C_out, 1), lambda j: (0, 0))],
        out_specs=pl.BlockSpec((N * C_out, out_hw_tile), lambda j: (0, j)),
        compiler_params=pltpu.CompilerParams(
            dimension_semantics=("parallel",),               # v7x: split store tiles over TCs
            vmem_limit_bytes=vmem_limit,
        ),
        cost_estimate=pl.CostEstimate(
            flops=0, transcendentals=0,
            bytes_accessed=int(N * C_out * HW * out_itemsize + N * C_out * 4)),
    )(y_rows)

    return out_flat.reshape(N, C_out, H, W)


def _reference(x, conv_weight, bn_gamma, bn_beta, bn_mean, bn_var, eps=1e-5):
    # Pure-JAX reference of the PyTorch forward (BN in eval mode).
    pooled = jnp.mean(x, axis=(2, 3))                                    # (N, C_in)
    w = conv_weight.reshape(conv_weight.shape[0], -1)                    # (C_out, C_in)
    y = pooled @ w.T                                                     # (N, C_out)
    y = bn_gamma * (y - bn_mean) / jnp.sqrt(bn_var + eps) + bn_beta
    y = jnp.maximum(y, 0.0)
    H, W = x.shape[-2:]
    return jnp.broadcast_to(y[:, :, None, None], (x.shape[0], w.shape[0], H, W))


if __name__ == "__main__":
    key = jax.random.PRNGKey(0)
    N, C_in, C_out, H, W = 2, 4, 8, 16, 16

    kx, kw, kg, kb, km, kv = jax.random.split(key, 6)
    x = jax.random.normal(kx, (N, C_in, H, W), dtype=jnp.float32)
    conv_weight = jax.random.normal(kw, (C_out, C_in, 1, 1), dtype=jnp.float32) * 0.1
    bn_gamma = 1.0 + 0.1 * jax.random.normal(kg, (C_out,), dtype=jnp.float32)
    bn_beta = 0.1 * jax.random.normal(kb, (C_out,), dtype=jnp.float32)
    bn_mean = 0.05 * jax.random.normal(km, (C_out,), dtype=jnp.float32)
    bn_var = 1.0 + 0.1 * jax.random.uniform(kv, (C_out,), dtype=jnp.float32)

    # small tiles here so the test exercises the multi-step reduction + broadcast grids
    out = aspp_pooling(x, conv_weight, bn_gamma, bn_beta, bn_mean, bn_var,
                       hw_tile=128, out_hw_tile=128)
    out = jax.block_until_ready(out)

    ref = _reference(x, conv_weight, bn_gamma, bn_beta, bn_mean, bn_var)
    assert out.shape == (N, C_out, H, W)
    assert jnp.allclose(out, ref, atol=1e-5, rtol=1e-5), "mismatch vs reference"

    print("KERNEL_OK")
</pallas_src>

<mosaic_0001>
module attributes {stable_mosaic.version = 11 : i64} {
  func.func @_partial_sum_kernel(%arg0: i32, %arg1: i32, %arg2: memref<2x4x128xf32, #tpu.memory_space<vmem>>, %arg3: memref<1x2x4xf32, #tpu.memory_space<vmem>>, %arg4: memref<2x4x128xf32, #tpu.memory_space<vmem>>) attributes {dimension_semantics = [#tpu.dimension_semantics<parallel>, #tpu.dimension_semantics<arbitrary>], iteration_bounds = array<i64: 1, 2>, scalar_prefetch = 0 : i64, scratch_operands = 1 : i64, tpu.core_type = #tpu.core_type<tc>, window_params = [{transform_indices = @transform_0, window_bounds = array<i64: 2, 4, 128>}, {transform_indices = @transform_1, window_bounds = array<i64: 1, 2, 4>}]} {
    %c0_i32 = arith.constant 0 : i32
    %0 = arith.cmpi eq, %arg1, %c0_i32 : i32
    %1 = arith.extui %0 : i1 to i32
    %c0_i32_0 = arith.constant 0 : i32
    %2 = arith.cmpi ne, %1, %c0_i32_0 : i32
    scf.if %2 {
      %cst = arith.constant 0.000000e+00 : f32
      %17 = vector.broadcast %cst : f32 to vector<2x4x128xf32>
      %c0 = arith.constant 0 : index
      %c0_7 = arith.constant 0 : index
      %c0_8 = arith.constant 0 : index
      %18 = vector.load %arg4[%c0, %c0_7, %c0_8] : memref<2x4x128xf32, #tpu.memory_space<vmem>>, vector<2x4x128xf32>
      tpu.vector_store %arg4[%c0, %c0_7, %c0_8], %17 {strides = array<i32>} : memref<2x4x128xf32, #tpu.memory_space<vmem>>, vector<2x4x128xf32>,
    } else {
    }
    %c2_i32 = arith.constant 2 : i32
    %3 = arith.muli %arg0, %c2_i32 : i32
    %4 = arith.addi %3, %arg1 : i32
    %c128_i32 = arith.constant 128 : i32
    %5 = arith.muli %4, %c128_i32 : i32
    %c128_i32_1 = arith.constant 128 : i32
    %6 = arith.addi %5, %c128_i32_1 : i32
    %c256_i32 = arith.constant 256 : i32
    %7 = arith.cmpi sle, %6, %c256_i32 : i32
    %8 = arith.extui %7 : i1 to i32
    %c0_i32_2 = arith.constant 0 : i32
    %9 = arith.cmpi ne, %8, %c0_i32_2 : i32
    scf.if %9 {
      %c0 = arith.constant 0 : index
      %c0_7 = arith.constant 0 : index
      %c0_8 = arith.constant 0 : index
      %17 = vector.load %arg4[%c0, %c0_7, %c0_8] : memref<2x4x128xf32, #tpu.memory_space<vmem>>, vector<2x4x128xf32>
      %c0_9 = arith.constant 0 : index
      %c0_10 = arith.constant 0 : index
      %c0_11 = arith.constant 0 : index
      %18 = vector.load %arg2[%c0_9, %c0_10, %c0_11] : memref<2x4x128xf32, #tpu.memory_space<vmem>>, vector<2x4x128xf32>
      %19 = arith.addf %17, %18 : vector<2x4x128xf32>
      %c0_12 = arith.constant 0 : index
      %c0_13 = arith.constant 0 : index
      %c0_14 = arith.constant 0 : index
      %20 = vector.load %arg4[%c0_12, %c0_13, %c0_14] : memref<2x4x128xf32, #tpu.memory_space<vmem>>, vector<2x4x128xf32>
      tpu.vector_store %arg4[%c0_12, %c0_13, %c0_14], %19 {strides = array<i32>} : memref<2x4x128xf32, #tpu.memory_space<vmem>>, vector<2x4x128xf32>,
    } else {
    }
    %c128_i32_3 = arith.constant 128 : i32
    %10 = arith.addi %5, %c128_i32_3 : i32
    %c256_i32_4 = arith.constant 256 : i32
    %11 = arith.cmpi sgt, %10, %c256_i32_4 : i32
    %12 = arith.extui %11 : i1 to i32
    %c0_i32_5 = arith.constant 0 : i32
    %13 = arith.cmpi ne, %12, %c0_i32_5 : i32
    scf.if %13 {
      %17 = tpu.iota {dimensions = array<i32: 2>} : vector<1x1x128xi32>
      %c0 = arith.constant 0 : index
      %c0_7 = arith.constant 0 : index
      %c0_8 = arith.constant 0 : index
      %18 = vector.load %arg4[%c0, %c0_7, %c0_8] : memref<2x4x128xf32, #tpu.memory_space<vmem>>, vector<2x4x128xf32>
      %c0_9 = arith.constant 0 : index
      %c0_10 = arith.constant 0 : index
      %c0_11 = arith.constant 0 : index
      %19 = vector.load %arg2[%c0_9, %c0_10, %c0_11] : memref<2x4x128xf32, #tpu.memory_space<vmem>>, vector<2x4x128xf32>
      %c0_i32_12 = arith.constant 0 : i32
      %20 = arith.addi %5, %c0_i32_12 : i32
      %c256_i32_13 = arith.constant 256 : i32
      %21 = arith.subi %c256_i32_13, %20 : i32
      %22 = vector.broadcast %21 : i32 to vector<1x1x128xi32>
      %23 = arith.cmpi slt, %17, %22 : vector<1x1x128xi32>
      %cst = arith.constant 0.000000e+00 : f32
      %24 = vector.shape_cast %23 : vector<1x1x128xi1> to vector<1x1x128xi1>
      %25 = vector.broadcast %24 : vector<1x1x128xi1> to vector<2x4x128xi1>
      %26 = vector.broadcast %cst : f32 to vector<2x4x128xf32>
      %27 = arith.select %25, %19, %26 : vector<2x4x128xi1>, vector<2x4x128xf32>
      %28 = arith.addf %18, %27 : vector<2x4x128xf32>
      %c0_14 = arith.constant 0 : index
      %c0_15 = arith.constant 0 : index
      %c0_16 = arith.constant 0 : index
      %29 = vector.load %arg4[%c0_14, %c0_15, %c0_16] : memref<2x4x128xf32, #tpu.memory_space<vmem>>, vector<2x4x128xf32>
      tpu.vector_store %arg4[%c0_14, %c0_15, %c0_16], %28 {strides = array<i32>} : memref<2x4x128xf32, #tpu.memory_space<vmem>>, vector<2x4x128xf32>,
    } else {
    }
    %c1_i32 = arith.constant 1 : i32
    %14 = arith.cmpi eq, %arg1, %c1_i32 : i32
    %15 = arith.extui %14 : i1 to i32
    %c0_i32_6 = arith.constant 0 : i32
    %16 = arith.cmpi ne, %15, %c0_i32_6 : i32
    scf.if %16 {
      %c0 = arith.constant 0 : index
      %c0_7 = arith.constant 0 : index
      %c0_8 = arith.constant 0 : index
      %17 = vector.load %arg4[%c0, %c0_7, %c0_8] : memref<2x4x128xf32, #tpu.memory_space<vmem>>, vector<2x4x128xf32>
      %cst = arith.constant dense<0.000000e+00> : vector<2x4xf32>
      %18 = vector.multi_reduction <add>, %17, %cst [2] : vector<2x4x128xf32> to vector<2x4xf32>
      %19 = vector.shape_cast %18 : vector<2x4xf32> to vector<1x2x4xf32>
      %c0_9 = arith.constant 0 : index
      %c0_10 = arith.constant 0 : index
      %c0_11 = arith.constant 0 : index
      %20 = vector.load %arg3[%c0_9, %c0_10, %c0_11] : memref<1x2x4xf32, #tpu.memory_space<vmem>>, vector<1x2x4xf32>
      tpu.vector_store %arg3[%c0_9, %c0_10, %c0_11], %19 {strides = array<i32>} : memref<1x2x4xf32, #tpu.memory_space<vmem>>, vector<1x2x4xf32>,
    } else {
    }
    return
  }
  func.func @transform_0(%arg0: i32, %arg1: i32) -> (i32, i32, i32) {
    %c2_i32 = arith.constant 2 : i32
    %0 = arith.muli %arg0, %c2_i32 : i32
    %1 = arith.addi %0, %arg1 : i32
    %c0_i32 = arith.constant 0 : i32
    %c0_i32_0 = arith.constant 0 : i32
    %c0_i32_1 = arith.constant 0 : i32
    return %c0_i32, %c0_i32_0, %1 : i32, i32, i32
  }
  func.func @transform_1(%arg0: i32, %arg1: i32) -> (i32, i32, i32) {
    %c0_i32 = arith.constant 0 : i32
    %c0_i32_0 = arith.constant 0 : i32
    %c0_i32_1 = arith.constant 0 : i32
    return %arg0, %c0_i32, %c0_i32_0 : i32, i32, i32
  }
}

</mosaic_0001>

<llo_original>
// kernel: tpu_custom_call.1
$region0: #{tpu_custom_call.1}
  #allocation0 [shape = 'u32[]', space=smem, size = 0x4, offset = 0x4, fixed_abs, tag = 'smem constant byte address 0x4 - core index']
  #allocation1 [shape = 'u32[144,128]{1,0:T(1,128)}', space=vmem, size = 0x12000, scoped, tag = 'internal scratch']
  #allocation2 [shape = 'f32[2,4,128]{2,1,0:T(4,128)}', space=vmem, size = 0x1000, scoped, tag = 'scratch operand']
  %s0 = inlined_call_operand.hbm [shape: f32[2,4,256], index: 0, kind: input, shape index: {}]
  %s1 = inlined_call_operand.hbm [shape: f32[1,2,4], index: 1, kind: output, shape index: {}]
  %s2 = sld [smem:[#allocation0]]
  $region57: #{tpu_custom_call.1} parent=0
    _
  %s4 = ssub.s32 1, %s2
  %s5 = scalar_select 0, %s4, %s2
  $region1: #{tpu_custom_call.1} parent=0
    #allocation3 [shape = 'u8[8192]{0}', space=vmem, size = 0x2000, scoped, tag = 'input window, operand 0']
    #allocation4 [shape = 's32[2]{0}', space=sflag, size = 0x8, scoped, tag = 'scoped memory for tpu_custom_call.1']
    #allocation5 [shape = 's32[2]{0}', space=sflag, size = 0x8, scoped, tag = 'scoped memory for tpu_custom_call.1']
    #allocation6 [shape = 'u8[1024]{0}', space=vmem, size = 0x400, scoped, tag = 'output window, operand 0, single buffered']
    %6 = vsyncpa [#allocation4], 0
    %s7 = scalar_lea.sflag [#allocation4], 1
    %8 = vsyncpa %s7, 0
    %9 = vsyncpa [#allocation5], 0
    loop: start=0, step=1, limit=4
    $region2: #{tpu_custom_call.1} parent=1 // loop_pre_header
      _
    $region3: #{tpu_custom_call.1} parent=1 // loop_header
      %s11 = sphi 0, %s15
      %p12 = scmp.ge.s32.totalorder %s11, 4
      %s18 = sphi 0, %s30
      %s19 = sphi 0, %s26
      %s20 = sphi 0, %s18
      %s21 = sphi 0, %s19
      %s22 = sphi 0, %s20
      %s23 = sphi 0, %s21
      %s37 = sphi 0, %s39
      %s40 = sphi 0, %s37
      %s41 = sphi 0, %s40
      %s57 = sphi 0, %s41
      %s63 = sphi 0, %s65
      %s66 = sphi 0, %s63
      %s67 = sphi 0, %s66
      %s83 = sphi 0, %s67
    $region4: #{tpu_custom_call.1} parent=1 // loop_header_branch
      %14 = sbr.rel (%p12) target = $region8
    $region5: #{tpu_custom_call.1} parent=1 // loop_body
      %s16 = ssub.s32 %s11, 1
      %s17 = ssub.s32 %s11, 2
      %s24 = sadd.s32 1, %s19
      %p25 = scmp.ge.s32.totalorder %s24, 2
      %s26 = scalar_select %p25, 0, %s24
      %s27 = sadd.s32 1, %s18
      %s28 = scalar_select %p25, %s27, %s18
      %p29 = scmp.ge.s32.totalorder %s28, 1
      %s30 = scalar_select %p29, 0, %s28
      %s31 = smul.u32 %s18, 2
      %s32 = sadd.s32 %s31, %s19
      %s33 = smul.u32 %s30, 2
      %s34 = sadd.s32 %s33, %s26
      %s35 = ssub.s32 %s32, %s34
      %p36 = scmp.eq.s32.totalorder %s35, 0
      %s38 = sadd.s32 %s37, 1
      %s39 = scalar_select %p36, %s37, %s38
      %p42 = pneg %p36
      %p43 = scmp.eq.s32.totalorder %s11, 1
      %p44 = por %p42, %p43
      %p45 = scmp.ne.s32.totalorder %s37, %s40
      %p46 = scmp.eq.s32.totalorder %s11, 0
      %p47 = por %p45, %p46
      %p48 = scmp.ne.s32.totalorder %s37, %s40
      %p49 = scmp.eq.s32.totalorder %s16, 1
      %p50 = por %p48, %p49
      %p51 = scmp.ne.s32.totalorder %s40, %s41
      %p52 = scmp.eq.s32.totalorder %s16, 0
      %p53 = por %p51, %p52
      %p54 = scmp.ne.s32.totalorder %s40, %s41
      %p55 = scmp.eq.s32.totalorder %s17, 1
      %p56 = por %p54, %p55
      %p58 = scmp.ne.s32.totalorder %s41, %s57
      %p59 = scmp.eq.s32.totalorder %s17, 0
      %p60 = por %p58, %p59
      %s61 = ssub.s32 %s18, %s30
      %p62 = scmp.eq.s32.totalorder %s61, 0
      %s64 = sadd.s32 %s63, 1
      %s65 = scalar_select %p62, %s63, %s64
      %p68 = pneg %p62
      %p69 = scmp.eq.s32.totalorder %s11, 1
      %p70 = por %p68, %p69
      %p71 = scmp.ne.s32.totalorder %s63, %s66
      %p72 = scmp.eq.s32.totalorder %s11, 0
      %p73 = por %p71, %p72
      %p74 = scmp.ne.s32.totalorder %s63, %s66
      %p75 = scmp.eq.s32.totalorder %s16, 1
      %p76 = por %p74, %p75
      %p77 = scmp.ne.s32.totalorder %s66, %s67
      %p78 = scmp.eq.s32.totalorder %s16, 0
      %p79 = por %p77, %p78
      %p80 = scmp.ne.s32.totalorder %s66, %s67
      %p81 = scmp.eq.s32.totalorder %s17, 1
      %p82 = por %p80, %p81
      %p84 = scmp.ne.s32.totalorder %s67, %s83
      %p85 = scmp.eq.s32.totalorder %s17, 0
      %p86 = por %p84, %p85
      %p87 = scmp.le.s32.totalorder 1, %s11
      %p88 = scmp.lt.s32.totalorder %s11, 3
      %p89 = pnand %p87, %p88
      %p90 = pneg %p89
      // Predicated region
      $region9: #{tpu_custom_call.1} parent=5 // pred_check
        _
      $region10: #{tpu_custom_call.1} parent=5 // pred_check_branch
        %92 = sbr.rel (%p89) target = $region12
      $region11: #{tpu_custom_call.1} parent=5 // pred_region
        %s93 = ssub.s32 %s11, 1
      $region12: #{tpu_custom_call.1} parent=5 // pred_fallthru
        _
      %p94 = scmp.lt.s32.totalorder %s11, 2
      // Predicated region
      $region13: #{tpu_custom_call.1} parent=5 // pred_check
        %p95 = pneg %p94
      $region14: #{tpu_custom_call.1} parent=5 // pred_check_branch
        %97 = sbr.rel (%p95) target = $region16
      $region15: #{tpu_custom_call.1} parent=5 // pred_region
        // Predicated region
        $region17: #{tpu_custom_call.1} parent=15 // pred_check
          %p98 = pneg %p47
        $region18: #{tpu_custom_call.1} parent=15 // pred_check_branch
          %100 = sbr.rel (%p98) target = $region20
        $region19: #{tpu_custom_call.1} parent=15 // pred_region
          %s101 = sand.u32 %s37, 1
          %s102 = scalar_lea.sflag [#allocation4], %s101
          %s103 = sand.u32 %s37, 1
          %s104 = smul.addr %s103, 8
          %s105 = scalar_lea.vmem [#allocation3], %s104
          %s106 = smul.u32 %s18, 2
          %s107 = sadd.s32 %s106, %s19
          %s109 = ssub.s32 128, 128
          %110 = vsyncadd %s102, %s109
          %s111 = smul.addr %s107, 64
          %s112 = scalar_lea.hbm %s0, %s111
          %s113 = sshll.u32 %s105, 4
          %s114 = int_to_ptr.vmem [resolvable:$true] %s113
          %119 = dma.hbm_to_vmem [thread:$0]  %s112, 128, %s114, %s102, 128, 64, 4
        $region20: #{tpu_custom_call.1} parent=15 // pred_fallthru
          _
      $region16: #{tpu_custom_call.1} parent=5 // pred_fallthru
        _
      %p120 = scmp.le.s32.totalorder 1, %s11
      %p121 = scmp.lt.s32.totalorder %s11, 3
      %p122 = pnand %p120, %p121
      %p123 = pneg %p122
      // Predicated region
      $region21: #{tpu_custom_call.1} parent=5 // pred_check
        _
      $region22: #{tpu_custom_call.1} parent=5 // pred_check_branch
        %125 = sbr.rel (%p122) target = $region24
      $region23: #{tpu_custom_call.1} parent=5 // pred_region
        %s126 = ssub.s32 %s11, 1
        %s127 = sand.u32 %s40, 1
        %s128 = scalar_lea.sflag [#allocation4], %s127
        %s129 = sand.u32 %s40, 1
        %s130 = smul.addr %s129, 8
        %s131 = scalar_lea.vmem [#allocation3], %s130
        // Predicated region
        $region25: #{tpu_custom_call.1} parent=23 // pred_check
          %p132 = pneg %p53
        $region26: #{tpu_custom_call.1} parent=23 // pred_check_branch
          %134 = sbr.rel (%p132) target = $region28
        $region27: #{tpu_custom_call.1} parent=23 // pred_region
          %135 = dma.done %s128, 128
        $region28: #{tpu_custom_call.1} parent=23 // pred_fallthru
          _
        %s136 = sand.u32 %s40, 1
        %s137 = scalar_lea.sflag [#allocation4], %s136
        %s138 = sand.u32 %s40, 1
        %s139 = smul.addr %s138, 8
        %s140 = scalar_lea.vmem [#allocation3], %s139
        %p141 = pneg %p53
        %p142 = pneg %p50
        %p143 = pneg %p79
        %p144 = pneg %p76
        %s145 = smul.u32 %s20, 2
        %s146 = sadd.s32 %s145, %s21
        %p147 = scmp.eq.s32.totalorder %s21, 0
        // Predicated region
        $region29: #{tpu_custom_call.1} parent=23 // pred_check
          %p148 = pneg %p147
        $region30: #{tpu_custom_call.1} parent=23 // pred_check_branch
          %150 = sbr.rel (%p148) target = $region32
        $region31: #{tpu_custom_call.1} parent=23 // pred_region
          %151 = vst [vmem:[#allocation2] sm:$0xf] 0.0
          %152 = vst [vmem:[#allocation2 + $0x4] sm:$0xf] 0.0
        $region32: #{tpu_custom_call.1} parent=23 // pred_fallthru
          _
        %s153 = smul.u32 %s20, 2
        %s154 = sadd.s32 %s153, %s21
        %s155 = smul.u32 %s154, 128
        %s156 = sadd.s32 %s155, 128
        %p157 = scmp.le.s32.totalorder %s156, 256
        // Predicated region
        $region33: #{tpu_custom_call.1} parent=23 // pred_check
          %p158 = pneg %p157
        $region34: #{tpu_custom_call.1} parent=23 // pred_check_branch
          %160 = sbr.rel (%p158) target = $region36
        $region35: #{tpu_custom_call.1} parent=23 // pred_region
          %v161 = vld [vmem:[#allocation2] sm:$0xf]
          %v162 = vld [vmem:[#allocation2 + $0x4] sm:$0xf]
          %v163 = vld [vmem:[%s131] sm:$0xf]
          %v164 = vld [vmem:[%s131 + $0x4] sm:$0xf]
          %v165 = vadd.f32 %v161, %v163
          %v166 = vadd.f32 %v162, %v164
          %167 = vst [vmem:[#allocation2] sm:$0xf] %v165
          %168 = vst [vmem:[#allocation2 + $0x4] sm:$0xf] %v166
        $region36: #{tpu_custom_call.1} parent=23 // pred_fallthru
          _
        %p169 = scmp.gt.s32.totalorder %s156, 256
        // Predicated region
        $region37: #{tpu_custom_call.1} parent=23 // pred_check
          %p170 = pneg %p169
        $region38: #{tpu_custom_call.1} parent=23 // pred_check_branch
          %172 = sbr.rel (%p170) target = $region40
        $region39: #{tpu_custom_call.1} parent=23 // pred_region
          %v173 = vlaneseq
          %v174 = vand.u32 %v173, 127
          %v175 = vld [vmem:[#allocation2] sm:$0xf]
          %v176 = vld [vmem:[#allocation2 + $0x4] sm:$0xf]
          %v177 = vld [vmem:[%s131] sm:$0xf]
          %v178 = vld [vmem:[%s131 + $0x4] sm:$0xf]
          %s179 = ssub.s32 256, %s155
          %v180 = vstv %s179
          %vm181 = vcmp.lt.s32.totalorder %v174, %v180
          %v182 = vsel %vm181, 1, 0
          %vm183 = vcmp.eq.s32.totalorder %v182, 1
          %v184 = vsel %vm183, %v177, 0.0
          %v185 = vsel %vm183, %v178, 0.0
          %v186 = vadd.f32 %v175, %v184
          %v187 = vadd.f32 %v176, %v185
          %188 = vst [vmem:[#allocation2] sm:$0xf] %v186
          %189 = vst [vmem:[#allocation2 + $0x4] sm:$0xf] %v187
        $region40: #{tpu_custom_call.1} parent=23 // pred_fallthru
          _
        %p190 = scmp.eq.s32.totalorder %s21, 1
        // Predicated region
        $region41: #{tpu_custom_call.1} parent=23 // pred_check
          %p191 = pneg %p190
        $region42: #{tpu_custom_call.1} parent=23 // pred_check_branch
          %193 = sbr.rel (%p191) target = $region44
        $region43: #{tpu_custom_call.1} parent=23 // pred_region
          %v194 = vld [vmem:[#allocation2] sm:$0xf]
          %v195 = vld [vmem:[#allocation2 + $0x4] sm:$0xf]
          %vm196 = vcmask 1043456
          %v197 = vsel %vm196, %v194, 0.0
          %198 = vadd.xlane.f32.xlu0 %v197
          %v199 = vpop.xlane.xlu0 %198
          %v200 = vsel %vm196, %v195, 0.0
          %201 = vadd.xlane.f32.xlu0 %v200
          %v202 = vpop.xlane.xlu0 %201
          %v205 = vlaneseq
          %v206 = vand.u32 %v205, 127
          %v207 = vlaneseq
          %v208 = vshrl.u32 %v207, 7
          %v209 = vsub.s32 %v206, %v208
          %v210 = vrot.slane %v199, %v209
          %v211 = vlaneseq
          %v212 = vshrl.u32 %v211, 7
          %v213 = vsub.s32 %v206, %v212
          %v214 = vrot.slane %v202, %v213
          %vm215 = vcmask 1041409
          %v216 = vsel %vm215, %v214, %v210
          %vm218 = vcmask 25600
          %219 = vst.msk [vmem:[#allocation6] sm:$0x3] %vm218, %v216
        $region44: #{tpu_custom_call.1} parent=23 // pred_fallthru
          _
        // Predicated region
        $region45: #{tpu_custom_call.1} parent=23 // pred_check
          %p220 = pneg %p76
        $region46: #{tpu_custom_call.1} parent=23 // pred_check_branch
          %222 = sbr.rel (%p220) target = $region48
        $region47: #{tpu_custom_call.1} parent=23 // pred_region
          %s224 = ssub.s32 32, 32
          %225 = vsyncadd [#allocation5], %s224
          %s226 = smul.addr %s20, 32
          %s227 = scalar_lea.hbm %s1, %s226
          %s229 = sshll.u32 [#allocation6], 4
          %s230 = int_to_ptr.vmem [resolvable:$true] %s229
          %232 = dma.vmem_to_hbm [thread:$0]  %s230, 32, %s227, [#allocation5]
        $region48: #{tpu_custom_call.1} parent=23 // pred_fallthru
          _
        // Predicated region
        $region49: #{tpu_custom_call.1} parent=23 // pred_check
          %p233 = pneg %p76
        $region50: #{tpu_custom_call.1} parent=23 // pred_check_branch
          %235 = sbr.rel (%p233) target = $region52
        $region51: #{tpu_custom_call.1} parent=23 // pred_region
          %236 = dma.done [#allocation5], 32
        $region52: #{tpu_custom_call.1} parent=23 // pred_fallthru
          _
      $region24: #{tpu_custom_call.1} parent=5 // pred_fallthru
        _
      %p237 = scmp.le.s32.totalorder 2, %s11
      // Predicated region
      $region53: #{tpu_custom_call.1} parent=5 // pred_check
        %p238 = pneg %p237
      $region54: #{tpu_custom_call.1} parent=5 // pred_check_branch
        %240 = sbr.rel (%p238) target = $region56
      $region55: #{tpu_custom_call.1} parent=5 // pred_region
        %s241 = ssub.s32 %s11, 2
      $region56: #{tpu_custom_call.1} parent=5 // pred_fallthru
        _
    $region6: #{tpu_custom_call.1} parent=1 // loop_footer
      %s15 = sadd.s32 1, %s11
    $region7: #{tpu_custom_call.1} parent=1 // loop_footer_branch
      %10 = sbr.rel target = $region3
    $region8: #{tpu_custom_call.1} parent=1 // loop_exit
      _
    %242 = vsyncpa [#allocation4], 1
    %s243 = scalar_lea.sflag [#allocation4], 1
    %244 = vsyncpa %s243, 1
    %245 = vsyncpa [#allocation5], 1
    %s246 = scalar_lea.sflag [#allocation5], 1
    %247 = vsyncpa %s246, 1

</llo_original>
